<compile_context>
chip_gen: v6e
topology: v6e:2x2x1
jax: 0.10.0
libtpu: 0.0.40
codegen_flags: <defaults>
</compile_context>

<pallas_src>
import jax
import jax.numpy as jnp
from jax.experimental import pallas as pl
from jax.experimental.pallas import tpu as pltpu


def _round_up(a, b):
    return ((a + b - 1) // b) * b


def mlp_kernel(xt_ref, w1_ref, b1_ref, w2t_ref, b2_ref, ot_ref):
    """Transposed-layout MLP tile: batch on the lane axis.

    xt_ref : (fea, TN)   input tile (batch on lanes)
    w1_ref : (hid, fea)  hidden.weight  (PyTorch layout)
    b1_ref : (hid, 1)    hidden.bias as a column
    w2t_ref: (hid, out)  predict.weight transposed
    b2_ref : (out, 1)    predict.bias as a column
    ot_ref : (out, TN)   output tile (lane-dense stores)
    """
    fea = xt_ref.shape[0]
    out = ot_ref.shape[0]

    xt = xt_ref[...]                                        # (fea, TN)

    if fea == 1:
        # K=1 "matmul" is just an outer-product broadcast: keep it on the VPU,
        # never push an almost-empty pass through the MXU.
        h = w1_ref[...] * xt + b1_ref[...]                  # (hid, TN)
    else:
        h = jnp.dot(w1_ref[...], xt,
                    preferred_element_type=jnp.float32) + b1_ref[...]

    h = jnp.maximum(h, 0.0)                                 # ReLU (VPU)

    if out == 1:
        # Output width 1: VPU multiply + XLU sublane reduction instead of a
        # degenerate MXU call with a masked 1-wide result.
        yt = jnp.sum(w2t_ref[...] * h, axis=0, keepdims=True) + b2_ref[...]
    else:
        yt = jax.lax.dot_general(
            w2t_ref[...], h, (((0,), (0,)), ((), ())),
            preferred_element_type=jnp.float32) + b2_ref[...]

    ot_ref[...] = yt.astype(ot_ref.dtype)                   # (out, TN), lane-dense


@jax.jit
def net_forward(x, w1, b1, w2, b2):
    """PyTorch nn.Linear semantics: y = relu(x @ w1.T + b1) @ w2.T + b2.

    x: (N, fea). w1: (hid, fea), b1: (hid,), w2: (out, hid), b2: (out,).
    Returns (N, out).
    """
    n, fea = x.shape
    hid = w1.shape[0]
    out = w2.shape[0]

    # Batch goes on the lane axis. Tile the batch in multiples of 128 lanes;
    # cap the tile at 1024 so tiles double-buffer nicely at large N while
    # staying far below even v7x's VMEM budget.
    tn = min(1024, _round_up(n, 128))
    n_pad = _round_up(n, tn)
    grid = (n_pad // tn,)

    # Glue (all under jit, outside the kernel): transpose to batch-on-lanes,
    # pad batch to a tile multiple, make biases columns, pre-transpose w2.
    xt = jnp.pad(jnp.asarray(x, jnp.float32).T, ((0, 0), (0, n_pad - n)))  # (fea, n_pad)
    w1f = jnp.asarray(w1, jnp.float32)                                      # (hid, fea)
    b1c = jnp.asarray(b1, jnp.float32).reshape(hid, 1)                      # (hid, 1)
    w2t = jnp.asarray(w2, jnp.float32).T                                    # (hid, out)
    b2c = jnp.asarray(b2, jnp.float32).reshape(out, 1)                      # (out, 1)

    # Weights/biases: constant index_map -> loaded once, stay VMEM-resident.
    const = lambda shape: pl.BlockSpec(shape, lambda i: (0, 0))

    yt = pl.pallas_call(
        mlp_kernel,
        out_shape=jax.ShapeDtypeStruct((out, n_pad), x.dtype),
        grid=grid,
        in_specs=[
            pl.BlockSpec((fea, tn), lambda i: (0, i)),   # x tile, pipelined over batch
            const((hid, fea)),
            const((hid, 1)),
            const((hid, out)),
            const((out, 1)),
        ],
        out_specs=pl.BlockSpec((out, tn), lambda i: (0, i)),
        compiler_params=pltpu.CompilerParams(
            dimension_semantics=("parallel",)),          # v7x: 2 TCs split batch tiles
    )(xt, w1f, b1c, w2t, b2c)

    return yt[:, :n].T.astype(x.dtype)                   # back to (N, out)


if __name__ == "__main__":
    feaNum, hidNum, outNum = 1, 10, 1
    N = 100

    # Deterministic parameter init (synthetic; PyTorch-Linear shapes).
    key = jax.random.PRNGKey(0)
    k1, k2, k3, k4 = jax.random.split(key, 4)
    w1 = jax.random.normal(k1, (hidNum, feaNum), dtype=jnp.float32) * 0.5
    b1 = jax.random.normal(k2, (hidNum,), dtype=jnp.float32) * 0.1
    w2 = jax.random.normal(k3, (outNum, hidNum), dtype=jnp.float32) * 0.5
    b2 = jax.random.normal(k4, (outNum,), dtype=jnp.float32) * 0.1

    # Same input as the reference script: x = unsqueeze(linspace(-1, 1, 100), 1)
    x = jnp.linspace(-1.0, 1.0, N, dtype=jnp.float32).reshape(N, 1)

    y = net_forward(x, w1, b1, w2, b2)
    y = jax.block_until_ready(y)

    # Pure-JAX reference check (PyTorch nn.Linear semantics).
    h_ref = jnp.maximum(x @ w1.T + b1, 0.0)
    y_ref = h_ref @ w2.T + b2
    assert y.shape == (N, outNum)
    assert jnp.allclose(y, y_ref, atol=1e-5, rtol=1e-5)

    print("KERNEL_OK")
</pallas_src>

<mosaic_0001>
module attributes {stable_mosaic.version = 11 : i64} {
  func.func @mlp_kernel(%arg0: i32, %arg1: memref<1x128xf32, #tpu.memory_space<vmem>>, %arg2: memref<10x1xf32, #tpu.memory_space<vmem>>, %arg3: memref<10x1xf32, #tpu.memory_space<vmem>>, %arg4: memref<10x1xf32, #tpu.memory_space<vmem>>, %arg5: memref<1x1xf32, #tpu.memory_space<vmem>>, %arg6: memref<1x128xf32, #tpu.memory_space<vmem>>) attributes {dimension_semantics = [#tpu.dimension_semantics<parallel>], iteration_bounds = array<i64: 1>, scalar_prefetch = 0 : i64, scratch_operands = 0 : i64, tpu.core_type = #tpu.core_type<tc>, window_params = [{transform_indices = @transform_0, window_bounds = array<i64: 1, 128>}, {pipeline_mode = #tpu.pipeline_mode<synchronous>, transform_indices = @transform_1, window_bounds = array<i64: 10, 1>}, {pipeline_mode = #tpu.pipeline_mode<synchronous>, transform_indices = @transform_2, window_bounds = array<i64: 10, 1>}, {pipeline_mode = #tpu.pipeline_mode<synchronous>, transform_indices = @transform_3, window_bounds = array<i64: 10, 1>}, {pipeline_mode = #tpu.pipeline_mode<synchronous>, transform_indices = @transform_4, window_bounds = array<i64: 1, 1>}, {transform_indices = @transform_5, window_bounds = array<i64: 1, 128>}]} {
    %c0 = arith.constant 0 : index
    %c0_0 = arith.constant 0 : index
    %0 = vector.load %arg1[%c0, %c0_0] : memref<1x128xf32, #tpu.memory_space<vmem>>, vector<1x128xf32>
    %c0_1 = arith.constant 0 : index
    %c0_2 = arith.constant 0 : index
    %1 = vector.load %arg2[%c0_1, %c0_2] : memref<10x1xf32, #tpu.memory_space<vmem>>, vector<10x1xf32>
    %2 = vector.broadcast %1 : vector<10x1xf32> to vector<10x128xf32>
    %3 = vector.broadcast %0 : vector<1x128xf32> to vector<10x128xf32>
    %4 = arith.mulf %2, %3 : vector<10x128xf32>
    %c0_3 = arith.constant 0 : index
    %c0_4 = arith.constant 0 : index
    %5 = vector.load %arg3[%c0_3, %c0_4] : memref<10x1xf32, #tpu.memory_space<vmem>>, vector<10x1xf32>
    %6 = vector.broadcast %5 : vector<10x1xf32> to vector<10x128xf32>
    %7 = arith.addf %4, %6 : vector<10x128xf32>
    %cst = arith.constant 0.000000e+00 : f32
    %8 = vector.broadcast %cst : f32 to vector<10x128xf32>
    %9 = arith.maximumf %7, %8 : vector<10x128xf32>
    %c0_5 = arith.constant 0 : index
    %c0_6 = arith.constant 0 : index
    %10 = vector.load %arg4[%c0_5, %c0_6] : memref<10x1xf32, #tpu.memory_space<vmem>>, vector<10x1xf32>
    %11 = vector.broadcast %10 : vector<10x1xf32> to vector<10x128xf32>
    %12 = arith.mulf %11, %9 : vector<10x128xf32>
    %cst_7 = arith.constant dense<0.000000e+00> : vector<128xf32>
    %13 = vector.multi_reduction <add>, %12, %cst_7 [0] : vector<10x128xf32> to vector<128xf32>
    %14 = vector.shape_cast %13 : vector<128xf32> to vector<1x128xf32>
    %c0_8 = arith.constant 0 : index
    %c0_9 = arith.constant 0 : index
    %15 = vector.load %arg5[%c0_8, %c0_9] : memref<1x1xf32, #tpu.memory_space<vmem>>, vector<1x1xf32>
    %16 = vector.broadcast %15 : vector<1x1xf32> to vector<1x128xf32>
    %17 = arith.addf %14, %16 : vector<1x128xf32>
    %c0_10 = arith.constant 0 : index
    %c0_11 = arith.constant 0 : index
    %18 = vector.load %arg6[%c0_10, %c0_11] : memref<1x128xf32, #tpu.memory_space<vmem>>, vector<1x128xf32>
    tpu.vector_store %arg6[%c0_10, %c0_11], %17 {strides = array<i32>} : memref<1x128xf32, #tpu.memory_space<vmem>>, vector<1x128xf32>,
    return
  }
  func.func @transform_0(%arg0: i32) -> (i32, i32) {
    %c0_i32 = arith.constant 0 : i32
    %c0_i32_0 = arith.constant 0 : i32
    return %c0_i32, %arg0 : i32, i32
  }
  func.func @transform_1(%arg0: i32) -> (i32, i32) {
    %c0_i32 = arith.constant 0 : i32
    %c0_i32_0 = arith.constant 0 : i32
    %c0_i32_1 = arith.constant 0 : i32
    return %c0_i32, %c0_i32_0 : i32, i32
  }
  func.func @transform_2(%arg0: i32) -> (i32, i32) {
    %c0_i32 = arith.constant 0 : i32
    %c0_i32_0 = arith.constant 0 : i32
    %c0_i32_1 = arith.constant 0 : i32
    return %c0_i32, %c0_i32_0 : i32, i32
  }
  func.func @transform_3(%arg0: i32) -> (i32, i32) {
    %c0_i32 = arith.constant 0 : i32
    %c0_i32_0 = arith.constant 0 : i32
    %c0_i32_1 = arith.constant 0 : i32
    return %c0_i32, %c0_i32_0 : i32, i32
  }
  func.func @transform_4(%arg0: i32) -> (i32, i32) {
    %c0_i32 = arith.constant 0 : i32
    %c0_i32_0 = arith.constant 0 : i32
    %c0_i32_1 = arith.constant 0 : i32
    return %c0_i32, %c0_i32_0 : i32, i32
  }
  func.func @transform_5(%arg0: i32) -> (i32, i32) {
    %c0_i32 = arith.constant 0 : i32
    %c0_i32_0 = arith.constant 0 : i32
    return %c0_i32, %arg0 : i32, i32
  }
}

</mosaic_0001>

<llo_original>
// kernel: net_forward.1
$region0: #{net_forward.1}
  #allocation0 [shape = 'u32[]', space=smem, size = 0x4, offset = 0x4, fixed_abs, tag = 'smem constant byte address 0x4 - core index']
  #allocation1 [shape = 'u32[144,128]{1,0:T(1,128)}', space=vmem, size = 0x12000, scoped, tag = 'internal scratch']
  #allocation2 [shape = 'f32[1,1]{1,0:T(1,128)S(1)}', space=vmem, size = 0x200, scoped, tag = 'scoped memory for net_forward.1']
  %s0 = inlined_call_operand.vmem [shape: f32[1,128], index: 0, kind: input, shape index: {}]
  %s1 = inlined_call_operand.vmem [shape: f32[10,1], index: 1, kind: input, shape index: {}]
  %s2 = inlined_call_operand.vmem [shape: f32[10,1], index: 2, kind: input, shape index: {}]
  %s3 = inlined_call_operand.vmem [shape: f32[10,1], index: 3, kind: input, shape index: {}]
  %s4 = inlined_call_operand.<no memory space> [shape: f32[1,1], index: 4, kind: input, shape index: {}]
  %s5 = inlined_call_operand.vmem [shape: f32[1,128], index: 5, kind: output, shape index: {}]
  %s6 = sld [smem:[#allocation0]]
  $region30: #{net_forward.1} parent=0
    _
  %s8 = ssub.s32 1, %s6
  %s9 = scalar_select 0, %s8, %s6
  %v10 = vstv %s4
  %11 = vst [vmem:[#allocation2] sm:$0x1] %v10
  // Predicated region
  $region2: #{net_forward.1} parent=0 // pred_check
    _
  $region3: #{net_forward.1} parent=0 // pred_check_branch
    %13 = sbr.rel (0) target = $region5
  $region4: #{net_forward.1} parent=0 // pred_region
    _
  $region5: #{net_forward.1} parent=0 // pred_fallthru
    _
  // Predicated region
  $region6: #{net_forward.1} parent=0 // pred_check
    _
  $region7: #{net_forward.1} parent=0 // pred_check_branch
    %15 = sbr.rel (0) target = $region9
  $region8: #{net_forward.1} parent=0 // pred_region
    _
  $region9: #{net_forward.1} parent=0 // pred_fallthru
    _
  // Predicated region
  $region10: #{net_forward.1} parent=0 // pred_check
    _
  $region11: #{net_forward.1} parent=0 // pred_check_branch
    %17 = sbr.rel (0) target = $region13
  $region12: #{net_forward.1} parent=0 // pred_region
    _
  $region13: #{net_forward.1} parent=0 // pred_fallthru
    _
  // Predicated region
  $region14: #{net_forward.1} parent=0 // pred_check
    _
  $region15: #{net_forward.1} parent=0 // pred_check_branch
    %19 = sbr.rel (0) target = $region17
  $region16: #{net_forward.1} parent=0 // pred_region
    _
  $region17: #{net_forward.1} parent=0 // pred_fallthru
    _
  // Predicated region
  $region18: #{net_forward.1} parent=0 // pred_check
    _
  $region19: #{net_forward.1} parent=0 // pred_check_branch
    %21 = sbr.rel (0) target = $region21
  $region20: #{net_forward.1} parent=0 // pred_region
    _
  $region21: #{net_forward.1} parent=0 // pred_fallthru
    _
  %v22 = vld [vmem:[%s0] sm:$0x1]
  %v23 = vld [vmem:[%s1] sm:$0xff]
  %v24 = vld [vmem:[%s1 + $0x8] sm:$0x3]
  %26 = vset.pattern.permute.xlu0 0
  %27 = vperm.xlu0 %26, %v23
  %v28 = vpop.permute.xlu0 %27
  %31 = vset.pattern.permute.xlu0 0
  %32 = vperm.xlu0 %31, %v24
  %v33 = vpop.permute.xlu0 %32
  %v36 = vlaneseq
  %v37 = vshrl.u32 %v36, 7
  %v38 = vsub.s32 0, %v37
  %v39 = vrot.slane %v22, %v38
  %v41 = vmul.f32 %v28, %v39
  %v42 = vmul.f32 %v33, %v39
  %v43 = vld [vmem:[%s2] sm:$0xff]
  %v44 = vld [vmem:[%s2 + $0x8] sm:$0x3]
  %46 = vset.pattern.permute.xlu0 0
  %47 = vperm.xlu0 %46, %v43
  %v48 = vpop.permute.xlu0 %47
  %51 = vset.pattern.permute.xlu0 0
  %52 = vperm.xlu0 %51, %v44
  %v53 = vpop.permute.xlu0 %52
  %v55 = vadd.f32 %v41, %v48
  %v56 = vadd.f32 %v42, %v53
  %v57 = vmax.f32 %v55, 0.0
  %v58 = vmax.f32 %v56, 0.0
  %v59 = vld [vmem:[%s3] sm:$0xff]
  %v60 = vld [vmem:[%s3 + $0x8] sm:$0x3]
  %62 = vset.pattern.permute.xlu0 0
  %63 = vperm.xlu0 %62, %v59
  %v64 = vpop.permute.xlu0 %63
  %67 = vset.pattern.permute.xlu0 0
  %68 = vperm.xlu0 %67, %v60
  %v69 = vpop.permute.xlu0 %68
  %v71 = vmul.f32 %v64, %v57
  %v72 = vmul.f32 %v69, %v58
  %vm73 = vcmask 1041408
  %v74 = vsel %vm73, %v72, 0.0
  %v75 = vadd.f32 %v71, %v74
  %v76 = vrot.slane %v75, 4
  %v77 = vadd.f32 %v75, %v76
  %v78 = vrot.slane %v77, 2
  %v79 = vadd.f32 %v77, %v78
  %v80 = vrot.slane %v79, 1
  %v81 = vadd.f32 %v79, %v80
  %v82 = vld [vmem:[#allocation2] sm:$0x1]
  %84 = vset.pattern.permute.xlu0 0
  %85 = vperm.xlu0 %84, %v82
  %v86 = vpop.permute.xlu0 %85
  %v88 = vlaneseq
  %v89 = vshrl.u32 %v88, 7
  %v90 = vsub.s32 0, %v89
  %v91 = vrot.slane %v86, %v90
  %v92 = vadd.f32 %v81, %v91
  %93 = vst [vmem:[%s5] sm:$0x1] %v92
  // Predicated region
  $region22: #{net_forward.1} parent=0 // pred_check
    _
  $region23: #{net_forward.1} parent=0 // pred_check_branch
    %95 = sbr.rel (0) target = $region25
  $region24: #{net_forward.1} parent=0 // pred_region
    _
  $region25: #{net_forward.1} parent=0 // pred_fallthru
    _
  // Predicated region
  $region26: #{net_forward.1} parent=0 // pred_check
    _
  $region27: #{net_forward.1} parent=0 // pred_check_branch
    %97 = sbr.rel (0) target = $region29
  $region28: #{net_forward.1} parent=0 // pred_region
    _
  $region29: #{net_forward.1} parent=0 // pred_fallthru
    _

</llo_original>
